<compile_context>
chip_gen: v5e
topology: v5e:2x2
jax: 0.10.0
libtpu: 0.0.40
codegen_flags: <defaults>
</compile_context>

<pallas_src>
import functools
import math

import jax
import jax.numpy as jnp
from jax.experimental import pallas as pl
from jax.experimental.pallas import tpu as pltpu


def _gelu_tanh(x):
    # GELU with tanh approximation, matching torch.nn.GELU(approximate='tanh').
    c = math.sqrt(2.0 / math.pi)
    x2 = x * x
    return 0.5 * x * (1.0 + jnp.tanh(c * (x + 0.044715 * x * x2)))


# ----------------------------------------------------------------------------
# Kernels
# ----------------------------------------------------------------------------
def mlp_resident_kernel(x_ref, wfc_ref, bfc_ref, wproj_ref, bproj_ref, o_ref,
                        *, compute_dtype):
    # x_ref:     (tm, C)   row tile of flattened activations
    # wfc_ref:   (C, H)    full c_fc weight (VMEM resident, constant index_map)
    # bfc_ref:   (1, H)    c_fc bias
    # wproj_ref: (H, C)    full c_proj weight (VMEM resident)
    # bproj_ref: (1, C)    c_proj bias
    # o_ref:     (tm, C)   output tile
    h = jnp.dot(x_ref[...], wfc_ref[...], preferred_element_type=jnp.float32)
    h = h.astype(compute_dtype) + bfc_ref[...].astype(compute_dtype)
    g = _gelu_tanh(h)
    y = jnp.dot(g.astype(wproj_ref.dtype), wproj_ref[...],
                preferred_element_type=jnp.float32)
    o_ref[...] = (y + bproj_ref[...].astype(jnp.float32)).astype(o_ref.dtype)


def mlp_stream_kernel(x_ref, wfc_ref, bfc_ref, wproj_ref, bproj_ref, o_ref,
                      *scratch, compute_dtype):
    # x_ref:     (tm, C)   row tile of flattened activations
    # wfc_ref:   (C, th)   c_fc weight chunk (in, out)
    # bfc_ref:   (1, th)   c_fc bias chunk
    # wproj_ref: (th, C)   c_proj weight chunk (in, out)
    # bproj_ref: (1, C)    c_proj bias (full)
    # o_ref:     (tm, C)   output tile (resident across the H axis)
    # scratch:   optional f32 accumulator; omitted when o_ref itself is f32.
    acc_ref = scratch[0] if scratch else o_ref
    h_idx = pl.program_id(1)

    @pl.when(h_idx == 0)
    def _():
        acc_ref[...] = jnp.zeros_like(acc_ref)

    # c_fc chunk on the MXU: (tm, C) @ (C, th) -> (tm, th), f32 accumulate.
    h = jnp.dot(x_ref[...], wfc_ref[...], preferred_element_type=jnp.float32)
    h = h.astype(compute_dtype) + bfc_ref[...].astype(compute_dtype)

    # GELU (tanh approximation) — VPU/EUP elementwise (bf16 on v6e/v7x).
    g = _gelu_tanh(h)

    # Partial c_proj on the MXU: (tm, th) @ (th, C) -> (tm, C); accumulate f32.
    acc_ref[...] += jnp.dot(g.astype(wproj_ref.dtype), wproj_ref[...],
                            preferred_element_type=jnp.float32)

    # Finalize: add c_proj bias exactly once and store in the output dtype.
    @pl.when(h_idx == pl.num_programs(1) - 1)
    def _():
        o_ref[...] = (acc_ref[...]
                      + bproj_ref[...].astype(jnp.float32)).astype(o_ref.dtype)


# ----------------------------------------------------------------------------
# Wrapper
# ----------------------------------------------------------------------------
def _vmem_capacity_bytes():
    """Physical VMEM per core; falls back to the smallest (v7x) if unknown."""
    try:
        return int(pltpu.get_tpu_info().vmem_capacity_bytes)
    except Exception:
        return 64 * 1024 * 1024


def mlp_pallas(x, w_fc, b_fc, w_proj, b_proj, *, tm=None, th=None,
               force_streaming=False):
    """x: (B, T, C). w_fc: (C, 4C). b_fc: (4C,). w_proj: (4C, C). b_proj: (C,)."""
    B, T, C = x.shape
    Cin, H = w_fc.shape
    assert Cin == C and w_proj.shape == (H, C)
    assert b_fc.shape == (H,) and b_proj.shape == (C,)
    M = B * T

    # Row tile: large enough to hide weight-streaming DMA behind MXU work and
    # 256-aligned for the v6e/v7x 2x256x256 MXU.  Clamped to the problem size.
    if tm is None:
        tm = 512
    tm = min(tm, M)
    if th is None:
        th = 512
    th = min(th, H)
    assert M % tm == 0, "batch*seq must be divisible by the row tile"
    assert H % th == 0, "hidden dim must be divisible by the hidden tile"
    assert tm == M or tm % 8 == 0
    assert th == H or th % 128 == 0

    x2 = x.reshape(M, C)
    b_fc2 = b_fc.reshape(1, H)
    b_proj2 = b_proj.reshape(1, C)

    x_isz = jnp.dtype(x.dtype).itemsize
    wfc_isz = jnp.dtype(w_fc.dtype).itemsize
    wproj_isz = jnp.dtype(w_proj.dtype).itemsize
    bfc_isz = jnp.dtype(b_fc.dtype).itemsize
    bproj_isz = jnp.dtype(b_proj.dtype).itemsize
    out_isz = x_isz

    # Elementwise math in bf16 when the weights are bf16 (v6e/v7x have bf16
    # VPU/EUP; on v5e this is still correct, just promoted internally).
    compute_dtype = (jnp.bfloat16 if jnp.dtype(w_fc.dtype) == jnp.bfloat16
                     else jnp.float32)

    vmem_cap = _vmem_capacity_bytes()
    vmem_budget = int(0.85 * vmem_cap)   # ~54 MiB on v7x, ~108 MiB on v5e/v6e

    # --- Resident-weights estimate (conservative: count pipeline 2x buffers) --
    resident_bytes = (
        2 * tm * C * x_isz                 # x tiles (double-buffered)
        + 2 * C * H * wfc_isz              # full c_fc weight
        + 2 * H * bfc_isz                  # c_fc bias
        + 2 * H * C * wproj_isz            # full c_proj weight
        + 2 * C * bproj_isz                # c_proj bias
        + 2 * tm * C * out_isz             # output tiles
        + 2 * tm * H * 4                   # (tm, H) intermediates (f32 bound)
    )
    use_resident = (not force_streaming) and (int(1.4 * resident_bytes)
                                              <= vmem_budget)

    if use_resident:
        kernel = functools.partial(mlp_resident_kernel,
                                   compute_dtype=compute_dtype)
        grid_spec = pltpu.PrefetchScalarGridSpec(
            num_scalar_prefetch=0,
            grid=(M // tm,),
            in_specs=[
                pl.BlockSpec((tm, C), lambda i: (i, 0)),   # x tile
                pl.BlockSpec((C, H), lambda i: (0, 0)),    # c_fc weight (resident)
                pl.BlockSpec((1, H), lambda i: (0, 0)),    # c_fc bias
                pl.BlockSpec((H, C), lambda i: (0, 0)),    # c_proj weight (resident)
                pl.BlockSpec((1, C), lambda i: (0, 0)),    # c_proj bias
            ],
            out_specs=pl.BlockSpec((tm, C), lambda i: (i, 0)),
            scratch_shapes=[],
        )
        dim_sem = ("parallel",)
        vmem_needed = int(1.4 * resident_bytes)
    else:
        # --- Streaming estimate ------------------------------------------------
        out_is_f32 = jnp.dtype(x.dtype) == jnp.float32
        stream_bytes = (
            2 * tm * C * x_isz               # x tiles
            + 2 * C * th * wfc_isz           # c_fc weight chunks
            + 2 * th * bfc_isz               # c_fc bias chunks
            + 2 * th * C * wproj_isz         # c_proj weight chunks
            + 2 * C * bproj_isz              # c_proj bias
            + 2 * tm * C * out_isz           # output tiles
            + (0 if out_is_f32 else tm * C * 4)  # f32 scratch accumulator
            + 2 * tm * th * 4                # (tm, th) matmul/GELU intermediates
        )
        kernel = functools.partial(mlp_stream_kernel,
                                   compute_dtype=compute_dtype)
        scratch_shapes = [] if out_is_f32 else [pltpu.VMEM((tm, C), jnp.float32)]
        grid_spec = pltpu.PrefetchScalarGridSpec(
            num_scalar_prefetch=0,
            grid=(M // tm, H // th),
            in_specs=[
                pl.BlockSpec((tm, C), lambda i, k: (i, 0)),   # x tile
                pl.BlockSpec((C, th), lambda i, k: (0, k)),   # c_fc weight chunk
                pl.BlockSpec((1, th), lambda i, k: (0, k)),   # c_fc bias chunk
                pl.BlockSpec((th, C), lambda i, k: (k, 0)),   # c_proj weight chunk
                pl.BlockSpec((1, C), lambda i, k: (0, 0)),    # c_proj bias
            ],
            out_specs=pl.BlockSpec((tm, C), lambda i, k: (i, 0)),
            scratch_shapes=scratch_shapes,
        )
        dim_sem = ("parallel", "arbitrary")
        vmem_needed = int(1.5 * stream_bytes)

    vmem_limit = min(max(vmem_needed, min(32 * 1024 * 1024, vmem_budget)),
                     vmem_budget)

    out = pl.pallas_call(
        kernel,
        out_shape=jax.ShapeDtypeStruct((M, C), x.dtype),
        grid_spec=grid_spec,
        compiler_params=pltpu.CompilerParams(
            dimension_semantics=dim_sem,
            vmem_limit_bytes=vmem_limit,
        ),
    )(x2, w_fc, b_fc2, w_proj, b_proj2)

    return out.reshape(B, T, C)


# ----------------------------------------------------------------------------
# Reference
# ----------------------------------------------------------------------------
def mlp_reference(x, w_fc, b_fc, w_proj, b_proj):
    h = jnp.einsum("btc,ch->bth", x.astype(jnp.float32),
                   w_fc.astype(jnp.float32)) + b_fc.astype(jnp.float32)
    g = _gelu_tanh(h)
    y = jnp.einsum("bth,hc->btc", g,
                   w_proj.astype(jnp.float32)) + b_proj.astype(jnp.float32)
    return y.astype(x.dtype)


if __name__ == "__main__":
    # Small GPT-2-style config kept lane-dense: n_embd = 128, hidden = 4 * n_embd.
    B, T, C = 2, 8, 128
    H = 4 * C

    key = jax.random.PRNGKey(0)
    kx, kwf, kbf, kwp, kbp = jax.random.split(key, 5)

    x = jax.random.normal(kx, (B, T, C), dtype=jnp.float32)
    # Parameters stored as (in, out) = PyTorch nn.Linear weight transposed.
    w_fc = jax.random.normal(kwf, (C, H), dtype=jnp.float32) * 0.02
    b_fc = jax.random.normal(kbf, (H,), dtype=jnp.float32) * 0.02
    w_proj = jax.random.normal(kwp, (H, C), dtype=jnp.float32) * 0.02
    b_proj = jax.random.normal(kbp, (C,), dtype=jnp.float32) * 0.02

    y_ref = mlp_reference(x, w_fc, b_fc, w_proj, b_proj)

    # 1) f32, resident-weights path (weights comfortably fit VMEM here).
    y1 = jax.block_until_ready(mlp_pallas(x, w_fc, b_fc, w_proj, b_proj))
    assert y1.shape == (B, T, C)
    assert jnp.allclose(y1, y_ref, atol=1e-4, rtol=1e-4), "resident f32 mismatch"

    # 2) f32, forced streaming path (th=256 -> 2 reduction steps; exercises the
    #    accumulate-directly-into-o_ref init/finalize logic).
    y2 = jax.block_until_ready(
        mlp_pallas(x, w_fc, b_fc, w_proj, b_proj, th=256, force_streaming=True))
    assert jnp.allclose(y2, y_ref, atol=1e-4, rtol=1e-4), "streaming f32 mismatch"

    # 3) bf16 path (production configuration: bf16 MXU matmuls, f32 accumulate).
    xb = x.astype(jnp.bfloat16)
    wfb, bfb = w_fc.astype(jnp.bfloat16), b_fc.astype(jnp.bfloat16)
    wpb, bpb = w_proj.astype(jnp.bfloat16), b_proj.astype(jnp.bfloat16)
    y3 = jax.block_until_ready(mlp_pallas(xb, wfb, bfb, wpb, bpb))
    assert jnp.allclose(y3.astype(jnp.float32), y_ref, atol=3e-2, rtol=3e-2), \
        "bf16 mismatch"

    print("KERNEL_OK")
</pallas_src>

<mosaic_0001>
module attributes {stable_mosaic.version = 11 : i64} {
  func.func @mlp_resident_kernel(%arg0: i32, %arg1: memref<16x128xf32, #tpu.memory_space<vmem>>, %arg2: memref<128x512xf32, #tpu.memory_space<vmem>>, %arg3: memref<1x512xf32, #tpu.memory_space<vmem>>, %arg4: memref<512x128xf32, #tpu.memory_space<vmem>>, %arg5: memref<1x128xf32, #tpu.memory_space<vmem>>, %arg6: memref<16x128xf32, #tpu.memory_space<vmem>>) attributes {dimension_semantics = [#tpu.dimension_semantics<parallel>], iteration_bounds = array<i64: 1>, scalar_prefetch = 0 : i64, scratch_operands = 0 : i64, tpu.core_type = #tpu.core_type<tc>, window_params = [{transform_indices = @transform_0, window_bounds = array<i64: 16, 128>}, {pipeline_mode = #tpu.pipeline_mode<synchronous>, transform_indices = @transform_1, window_bounds = array<i64: 128, 512>}, {pipeline_mode = #tpu.pipeline_mode<synchronous>, transform_indices = @transform_2, window_bounds = array<i64: 1, 512>}, {pipeline_mode = #tpu.pipeline_mode<synchronous>, transform_indices = @transform_3, window_bounds = array<i64: 512, 128>}, {pipeline_mode = #tpu.pipeline_mode<synchronous>, transform_indices = @transform_4, window_bounds = array<i64: 1, 128>}, {transform_indices = @transform_5, window_bounds = array<i64: 16, 128>}]} {
    %c0 = arith.constant 0 : index
    %c0_0 = arith.constant 0 : index
    %0 = vector.load %arg1[%c0, %c0_0] : memref<16x128xf32, #tpu.memory_space<vmem>>, vector<16x128xf32>
    %c0_1 = arith.constant 0 : index
    %c0_2 = arith.constant 0 : index
    %1 = vector.load %arg2[%c0_1, %c0_2] : memref<128x512xf32, #tpu.memory_space<vmem>>, vector<128x512xf32>
    %cst = arith.constant dense<0.000000e+00> : vector<16x512xf32>
    %2 = tpu.matmul %0, %1, %cst {dimension_numbers = #tpu.dot_dimension_numbers<[1], [0], [0], [1], [0, 0, 1, 1], [], []>} : vector<16x128xf32>, vector<128x512xf32>, vector<16x512xf32> -> vector<16x512xf32>
    %c0_3 = arith.constant 0 : index
    %c0_4 = arith.constant 0 : index
    %3 = vector.load %arg3[%c0_3, %c0_4] : memref<1x512xf32, #tpu.memory_space<vmem>>, vector<1x512xf32>
    %4 = vector.broadcast %3 : vector<1x512xf32> to vector<16x512xf32>
    %5 = arith.addf %2, %4 : vector<16x512xf32>
    %6 = arith.mulf %5, %5 : vector<16x512xf32>
    %cst_5 = arith.constant 5.000000e-01 : f32
    %7 = vector.broadcast %cst_5 : f32 to vector<16x512xf32>
    %8 = arith.mulf %7, %5 : vector<16x512xf32>
    %cst_6 = arith.constant 4.471500e-02 : f32
    %9 = vector.broadcast %cst_6 : f32 to vector<16x512xf32>
    %10 = arith.mulf %9, %5 : vector<16x512xf32>
    %11 = arith.mulf %10, %6 : vector<16x512xf32>
    %12 = arith.addf %5, %11 : vector<16x512xf32>
    %cst_7 = arith.constant 0.797884583 : f32
    %13 = vector.broadcast %cst_7 : f32 to vector<16x512xf32>
    %14 = arith.mulf %13, %12 : vector<16x512xf32>
    %15 = math.tanh %14 : vector<16x512xf32>
    %cst_8 = arith.constant 1.000000e+00 : f32
    %16 = vector.broadcast %cst_8 : f32 to vector<16x512xf32>
    %17 = arith.addf %16, %15 : vector<16x512xf32>
    %18 = arith.mulf %8, %17 : vector<16x512xf32>
    %c0_9 = arith.constant 0 : index
    %c0_10 = arith.constant 0 : index
    %19 = vector.load %arg4[%c0_9, %c0_10] : memref<512x128xf32, #tpu.memory_space<vmem>>, vector<512x128xf32>
    %cst_11 = arith.constant dense<0.000000e+00> : vector<16x128xf32>
    %20 = tpu.matmul %18, %19, %cst_11 {dimension_numbers = #tpu.dot_dimension_numbers<[1], [0], [0], [1], [0, 0, 1, 1], [], []>} : vector<16x512xf32>, vector<512x128xf32>, vector<16x128xf32> -> vector<16x128xf32>
    %c0_12 = arith.constant 0 : index
    %c0_13 = arith.constant 0 : index
    %21 = vector.load %arg5[%c0_12, %c0_13] : memref<1x128xf32, #tpu.memory_space<vmem>>, vector<1x128xf32>
    %22 = vector.broadcast %21 : vector<1x128xf32> to vector<16x128xf32>
    %23 = arith.addf %20, %22 : vector<16x128xf32>
    %c0_14 = arith.constant 0 : index
    %c0_15 = arith.constant 0 : index
    %24 = vector.load %arg6[%c0_14, %c0_15] : memref<16x128xf32, #tpu.memory_space<vmem>>, vector<16x128xf32>
    tpu.vector_store %arg6[%c0_14, %c0_15], %23 {strides = array<i32>} : memref<16x128xf32, #tpu.memory_space<vmem>>, vector<16x128xf32>,
    return
  }
  func.func @transform_0(%arg0: i32) -> (i32, i32) {
    %c0_i32 = arith.constant 0 : i32
    %c0_i32_0 = arith.constant 0 : i32
    return %arg0, %c0_i32 : i32, i32
  }
  func.func @transform_1(%arg0: i32) -> (i32, i32) {
    %c0_i32 = arith.constant 0 : i32
    %c0_i32_0 = arith.constant 0 : i32
    %c0_i32_1 = arith.constant 0 : i32
    return %c0_i32, %c0_i32_0 : i32, i32
  }
  func.func @transform_2(%arg0: i32) -> (i32, i32) {
    %c0_i32 = arith.constant 0 : i32
    %c0_i32_0 = arith.constant 0 : i32
    %c0_i32_1 = arith.constant 0 : i32
    return %c0_i32, %c0_i32_0 : i32, i32
  }
  func.func @transform_3(%arg0: i32) -> (i32, i32) {
    %c0_i32 = arith.constant 0 : i32
    %c0_i32_0 = arith.constant 0 : i32
    %c0_i32_1 = arith.constant 0 : i32
    return %c0_i32, %c0_i32_0 : i32, i32
  }
  func.func @transform_4(%arg0: i32) -> (i32, i32) {
    %c0_i32 = arith.constant 0 : i32
    %c0_i32_0 = arith.constant 0 : i32
    %c0_i32_1 = arith.constant 0 : i32
    return %c0_i32, %c0_i32_0 : i32, i32
  }
  func.func @transform_5(%arg0: i32) -> (i32, i32) {
    %c0_i32 = arith.constant 0 : i32
    %c0_i32_0 = arith.constant 0 : i32
    return %arg0, %c0_i32 : i32, i32
  }
}

</mosaic_0001>

<llo_original>
// kernel: tpu_custom_call.1
$region0: #{tpu_custom_call.1}
  #allocation0 [shape = 'u32[]', space=smem, size = 0x4, offset = 0x4, fixed_abs, tag = 'smem constant byte address 0x4 - core index']
  #allocation1 [shape = 'u32[72,128]{1,0:T(1,128)}', space=vmem, size = 0x9000, scoped, tag = 'internal scratch']
  %s0 = inlined_call_operand.hbm [shape: f32[16,128], index: 0, kind: input, shape index: {}]
  %s1 = inlined_call_operand.hbm [shape: f32[128,512], index: 1, kind: input, shape index: {}]
  %s2 = inlined_call_operand.hbm [shape: f32[1,512], index: 2, kind: input, shape index: {}]
  %s3 = inlined_call_operand.hbm [shape: f32[512,128], index: 3, kind: input, shape index: {}]
  %s4 = inlined_call_operand.vmem [shape: f32[1,128], index: 4, kind: input, shape index: {}]
  %s5 = inlined_call_operand.hbm [shape: f32[16,128], index: 5, kind: output, shape index: {}]
  %s6 = sld [smem:[#allocation0]]
  $region46: #{tpu_custom_call.1} parent=0
    _
  %s8 = ssub.s32 1, %s6
  %s9 = scalar_select 0, %s8, %s6
  $region1: #{tpu_custom_call.1} parent=0
    #allocation2 [shape = 'u8[8192]{0}', space=vmem, size = 0x2000, scoped, tag = 'input window, operand 0, single buffered']
    #allocation3 [shape = 's32[1]{0}', space=sflag, size = 0x4, scoped, tag = 'scoped memory for tpu_custom_call.1']
    #allocation4 [shape = 's32[1]{0}', space=sflag, size = 0x4, scoped, tag = 'scoped memory for tpu_custom_call.1']
    #allocation5 [shape = 'u8[262144]{0}', space=vmem, size = 0x40000, scoped, tag = 'input window, operand 1, single buffered']
    #allocation6 [shape = 's32[1]{0}', space=sflag, size = 0x4, scoped, tag = 'scoped memory for tpu_custom_call.1']
    #allocation7 [shape = 'u8[2048]{0}', space=vmem, size = 0x800, scoped, tag = 'input window, operand 2, single buffered']
    #allocation8 [shape = 'u8[262144]{0}', space=vmem, size = 0x40000, scoped, tag = 'input window, operand 3, single buffered']
    #allocation9 [shape = 's32[1]{0}', space=sflag, size = 0x4, scoped, tag = 'scoped memory for tpu_custom_call.1']
    #allocation10 [shape = 'u8[8192]{0}', space=vmem, size = 0x2000, scoped, tag = 'output window, operand 0, single buffered']
    %10 = vsyncpa [#allocation3], 0
    %11 = vsyncpa [#allocation6], 0
    %12 = vsyncpa [#allocation9], 0
    %13 = vsyncpa [#allocation4], 0
    // Predicated region
    $region2: #{tpu_custom_call.1} parent=1 // pred_check
      _
    $region3: #{tpu_custom_call.1} parent=1 // pred_check_branch
      %15 = sbr.rel (0) target = $region5
    $region4: #{tpu_custom_call.1} parent=1 // pred_region
      %17 = vsyncadd [#allocation3], 0
      %s18 = sshll.u32 %s0, 4
      %s19 = int_to_ptr.hbm [resolvable:$true] %s18
      %s20 = sshll.u32 [#allocation2], 4
      %s21 = int_to_ptr.vmem [resolvable:$true] %s20
      %26 = dma.hbm_to_vmem [thread:$0]  %s19, 256, %s21, [#allocation3], 128, 128, 8
    $region5: #{tpu_custom_call.1} parent=1 // pred_fallthru
      _
    // Predicated region
    $region6: #{tpu_custom_call.1} parent=1 // pred_check
      _
    $region7: #{tpu_custom_call.1} parent=1 // pred_check_branch
      %28 = sbr.rel (0) target = $region9
    $region8: #{tpu_custom_call.1} parent=1 // pred_region
      %30 = vsyncadd [#allocation6], 0
      %s31 = sshll.u32 %s1, 4
      %s32 = int_to_ptr.hbm [resolvable:$true] %s31
      %s33 = sshll.u32 [#allocation5], 4
      %s34 = int_to_ptr.vmem [resolvable:$true] %s33
      %39 = dma.hbm_to_vmem [thread:$0]  %s32, 8192, %s34, [#allocation6], 512, 512, 32
    $region9: #{tpu_custom_call.1} parent=1 // pred_fallthru
      _
    // Predicated region
    $region10: #{tpu_custom_call.1} parent=1 // pred_check
      _
    $region11: #{tpu_custom_call.1} parent=1 // pred_check_branch
      %41 = sbr.rel (0) target = $region13
    $region12: #{tpu_custom_call.1} parent=1 // pred_region
      %43 = vsyncadd [#allocation6], 0
      %s45 = sshll.u32 %s2, 4
      %s46 = int_to_ptr.hbm [resolvable:$true] %s45
      %s47 = sshll.u32 [#allocation7], 4
      %s48 = int_to_ptr.vmem [resolvable:$true] %s47
      %50 = dma.hbm_to_vmem [thread:$0]  %s46, 64, %s48, [#allocation6]
    $region13: #{tpu_custom_call.1} parent=1 // pred_fallthru
      _
    // Predicated region
    $region14: #{tpu_custom_call.1} parent=1 // pred_check
      _
    $region15: #{tpu_custom_call.1} parent=1 // pred_check_branch
      %52 = sbr.rel (0) target = $region17
    $region16: #{tpu_custom_call.1} parent=1 // pred_region
      %54 = vsyncadd [#allocation9], 0
      %s55 = sshll.u32 %s3, 4
      %s56 = int_to_ptr.hbm [resolvable:$true] %s55
      %s57 = sshll.u32 [#allocation8], 4
      %s58 = int_to_ptr.vmem [resolvable:$true] %s57
      %63 = dma.hbm_to_vmem [thread:$0]  %s56, 8192, %s58, [#allocation9], 128, 128, 8
    $region17: #{tpu_custom_call.1} parent=1 // pred_fallthru
      _
    // Predicated region
    $region18: #{tpu_custom_call.1} parent=1 // pred_check
      _
    $region19: #{tpu_custom_call.1} parent=1 // pred_check_branch
      %65 = sbr.rel (0) target = $region21
    $region20: #{tpu_custom_call.1} parent=1 // pred_region
      _
    $region21: #{tpu_custom_call.1} parent=1 // pred_fallthru
      _
    // Predicated region
    $region22: #{tpu_custom_call.1} parent=1 // pred_check
      _
    $region23: #{tpu_custom_call.1} parent=1 // pred_check_branch
      %67 = sbr.rel (0) target = $region25
    $region24: #{tpu_custom_call.1} parent=1 // pred_region
      %69 = dma.done [#allocation3], 256
    $region25: #{tpu_custom_call.1} parent=1 // pred_fallthru
      _
    // Predicated region
    $region26: #{tpu_custom_call.1} parent=1 // pred_check
      _
    $region27: #{tpu_custom_call.1} parent=1 // pred_check_branch
      %71 = sbr.rel (0) target = $region29
    $region28: #{tpu_custom_call.1} parent=1 // pred_region
      %73 = dma.done [#allocation6], 8192
    $region29: #{tpu_custom_call.1} parent=1 // pred_fallthru
      _
    // Predicated region
    $region30: #{tpu_custom_call.1} parent=1 // pred_check
      _
    $region31: #{tpu_custom_call.1} parent=1 // pred_check_branch
      %75 = sbr.rel (0) target = $region33
    $region32: #{tpu_custom_call.1} parent=1 // pred_region
      %77 = dma.done [#allocation6], 64
    $region33: #{tpu_custom_call.1} parent=1 // pred_fallthru
      _
    // Predicated region
    $region34: #{tpu_custom_call.1} parent=1 // pred_check
      _
    $region35: #{tpu_custom_call.1} parent=1 // pred_check_branch
      %79 = sbr.rel (0) target = $region37
    $region36: #{tpu_custom_call.1} parent=1 // pred_region
      %81 = dma.done [#allocation9], 8192
    $region37: #{tpu_custom_call.1} parent=1 // pred_fallthru
      _
    %v82 = vld [vmem:[#allocation2] sm:$0xff]
    %v83 = vld [vmem:[#allocation2 + $0x8] sm:$0xff]
    %v84 = vld [vmem:[#allocation5] sm:$0xff]
    %v85 = vld [vmem:[#allocation5 + $0x8] sm:$0xff]
    %v86 = vld [vmem:[#allocation5 + $0x10] sm:$0xff]
    %v87 = vld [vmem:[#allocation5 + $0x18] sm:$0xff]
    %v88 = vld [vmem:[#allocation5 + $0x20] sm:$0xff]
    %v89 = vld [vmem:[#allocation5 + $0x28] sm:$0xff]
    %v90 = vld [vmem:[#allocation5 + $0x30] sm:$0xff]
    %v91 = vld [vmem:[#allocation5 + $0x38] sm:$0xff]
    %v92 = vld [vmem:[#allocation5 + $0x40] sm:$0xff]
    %v93 = vld [vmem:[#allocation5 + $0x48] sm:$0xff]
    %v94 = vld [vmem:[#allocation5 + $0x50] sm:$0xff]
    %v95 = vld [vmem:[#allocation5 + $0x58] sm:$0xff]
    %v96 = vld [vmem:[#allocation5 + $0x60] sm:$0xff]
    %v97 = vld [vmem:[#allocation5 + $0x68] sm:$0xff]
    %v98 = vld [vmem:[#allocation5 + $0x70] sm:$0xff]
    %v99 = vld [vmem:[#allocation5 + $0x78] sm:$0xff]
    %v100 = vld [vmem:[#allocation5 + $0x80] sm:$0xff]
    %v101 = vld [vmem:[#allocation5 + $0x88] sm:$0xff]
    %v102 = vld [vmem:[#allocation5 + $0x90] sm:$0xff]
    %v103 = vld [vmem:[#allocation5 + $0x98] sm:$0xff]
    %v104 = vld [vmem:[#allocation5 + $0xa0] sm:$0xff]
    %v105 = vld [vmem:[#allocation5 + $0xa8] sm:$0xff]
    %v106 = vld [vmem:[#allocation5 + $0xb0] sm:$0xff]
    %v107 = vld [vmem:[#allocation5 + $0xb8] sm:$0xff]
    %v108 = vld [vmem:[#allocation5 + $0xc0] sm:$0xff]
    %v109 = vld [vmem:[#allocation5 + $0xc8] sm:$0xff]
    %v110 = vld [vmem:[#allocation5 + $0xd0] sm:$0xff]
    %v111 = vld [vmem:[#allocation5 + $0xd8] sm:$0xff]
    %v112 = vld [vmem:[#allocation5 + $0xe0] sm:$0xff]
    %v113 = vld [vmem:[#allocation5 + $0xe8] sm:$0xff]
    %v114 = vld [vmem:[#allocation5 + $0xf0] sm:$0xff]
    %v115 = vld [vmem:[#allocation5 + $0xf8] sm:$0xff]
    %v116 = vld [vmem:[#allocation5 + $0x100] sm:$0xff]
    %v117 = vld [vmem:[#allocation5 + $0x108] sm:$0xff]
    %v118 = vld [vmem:[#allocation5 + $0x110] sm:$0xff]
    %v119 = vld [vmem:[#allocation5 + $0x118] sm:$0xff]
    %v120 = vld [vmem:[#allocation5 + $0x120] sm:$0xff]
    %v121 = vld [vmem:[#allocation5 + $0x128] sm:$0xff]
    %v122 = vld [vmem:[#allocation5 + $0x130] sm:$0xff]
    %v123 = vld [vmem:[#allocation5 + $0x138] sm:$0xff]
    %v124 = vld [vmem:[#allocation5 + $0x140] sm:$0xff]
    %v125 = vld [vmem:[#allocation5 + $0x148] sm:$0xff]
    %v126 = vld [vmem:[#allocation5 + $0x150] sm:$0xff]
    %v127 = vld [vmem:[#allocation5 + $0x158] sm:$0xff]
    %v128 = vld [vmem:[#allocation5 + $0x160] sm:$0xff]
    %v129 = vld [vmem:[#allocation5 + $0x168] sm:$0xff]
    %v130 = vld [vmem:[#allocation5 + $0x170] sm:$0xff]
    %v131 = vld [vmem:[#allocation5 + $0x178] sm:$0xff]
    %v132 = vld [vmem:[#allocation5 + $0x180] sm:$0xff]
    %v133 = vld [vmem:[#allocation5 + $0x188] sm:$0xff]
    %v134 = vld [vmem:[#allocation5 + $0x190] sm:$0xff]
    %v135 = vld [vmem:[#allocation5 + $0x198] sm:$0xff]
    %v136 = vld [vmem:[#allocation5 + $0x1a0] sm:$0xff]
    %v137 = vld [vmem:[#allocation5 + $0x1a8] sm:$0xff]
    %v138 = vld [vmem:[#allocation5 + $0x1b0] sm:$0xff]
    %v139 = vld [vmem:[#allocation5 + $0x1b8] sm:$0xff]
    %v140 = vld [vmem:[#allocation5 + $0x1c0] sm:$0xff]
    %v141 = vld [vmem:[#allocation5 + $0x1c8] sm:$0xff]
    %v142 = vld [vmem:[#allocation5 + $0x1d0] sm:$0xff]
    %v143 = vld [vmem:[#allocation5 + $0x1d8] sm:$0xff]
    %v144 = vld [vmem:[#allocation5 + $0x1e0] sm:$0xff]
    %v145 = vld [vmem:[#allocation5 + $0x1e8] sm:$0xff]
    %v146 = vld [vmem:[#allocation5 + $0x1f0] sm:$0xff]
    %v147 = vld [vmem:[#allocation5 + $0x1f8] sm:$0xff]
    %v148 = vld [vmem:[#allocation7] sm:$0xf]
    %v150 = vperm.slane %v148, 0
    %v151 = vperm.slane %v148, 1
    %v152 = vperm.slane %v148, 2
    %v153 = vperm.slane %v148, 3
    %158 = vmatpush.msra.mxu0 %v144
    %159 = vmatpush.msra.mxu0 %v140
    %160 = vmatpush.msra.mxu0 %v136
    %161 = vmatpush.msra.mxu0 %v132
    %162 = vmatpush.msra.mxu0 %v128
    %163 = vmatpush.msra.mxu0 %v124
    %164 = vmatpush.msra.mxu0 %v120
    %165 = vmatpush.msra.mxu0 %v116
    %166 = vmatpush.msra.mxu0 %v112
    %167 = vmatpush.msra.mxu0 %v108
    %168 = vmatpush.msra.mxu0 %v104
    %169 = vmatpush.msra.mxu0 %v100
    %170 = vmatpush.msra.mxu0 %v96
    %171 = vmatpush.msra.mxu0 %v92
    %172 = vmatpush.msra.mxu0 %v88
    %173 = vmatpush.msra.mxu0 %v84
    %174 = vmatmul.f32.gmra.mxu0 %v82
    %v175 = vpop.f32.mrf.mxu0
    %v176 = vadd.f32 %v150, %v175
    %177 = vmatmul.f32.gmra.mxu0 %v83
    %v178 = vpop.f32.mrf.mxu0
    %v179 = vadd.f32 %v150, %v178
    %180 = vdwg.mxu0
    %181 = vmatpush.msra.mxu0 %v145
    %182 = vmatpush.msra.mxu0 %v141
    %183 = vmatpush.msra.mxu0 %v137
    %184 = vmatpush.msra.mxu0 %v133
    %185 = vmatpush.msra.mxu0 %v129
    %186 = vmatpush.msra.mxu0 %v125
    %187 = vmatpush.msra.mxu0 %v121
    %188 = vmatpush.msra.mxu0 %v117
    %189 = vmatpush.msra.mxu0 %v113
    %190 = vmatpush.msra.mxu0 %v109
    %191 = vmatpush.msra.mxu0 %v105
    %192 = vmatpush.msra.mxu0 %v101
    %193 = vmatpush.msra.mxu0 %v97
    %194 = vmatpush.msra.mxu0 %v93
    %195 = vmatpush.msra.mxu0 %v89
    %196 = vmatpush.msra.mxu0 %v85
    %197 = vmatmul.f32.gmra.mxu0 %v82
    %v198 = vpop.f32.mrf.mxu0
    %v199 = vadd.f32 %v151, %v198
    %200 = vmatmul.f32.gmra.mxu0 %v83
    %v201 = vpop.f32.mrf.mxu0
    %v202 = vadd.f32 %v151, %v201
    %203 = vdwg.mxu0
    %204 = vmatpush.msra.mxu0 %v146
    %205 = vmatpush.msra.mxu0 %v142
    %206 = vmatpush.msra.mxu0 %v138
    %207 = vmatpush.msra.mxu0 %v134
    %208 = vmatpush.msra.mxu0 %v130
    %209 = vmatpush.msra.mxu0 %v126
    %210 = vmatpush.msra.mxu0 %v122
    %211 = vmatpush.msra.mxu0 %v118
    %212 = vmatpush.msra.mxu0 %v114
    %213 = vmatpush.msra.mxu0 %v110
    %214 = vmatpush.msra.mxu0 %v106
    %215 = vmatpush.msra.mxu0 %v102
    %216 = vmatpush.msra.mxu0 %v98
    %217 = vmatpush.msra.mxu0 %v94
    %218 = vmatpush.msra.mxu0 %v90
    %219 = vmatpush.msra.mxu0 %v86
    %220 = vmatmul.f32.gmra.mxu0 %v82
    %v221 = vpop.f32.mrf.mxu0
    %v222 = vadd.f32 %v152, %v221
    %223 = vmatmul.f32.gmra.mxu0 %v83
    %v224 = vpop.f32.mrf.mxu0
    %v225 = vadd.f32 %v152, %v224
    %226 = vdwg.mxu0
    %227 = vmatpush.msra.mxu0 %v147
    %228 = vmatpush.msra.mxu0 %v143
    %229 = vmatpush.msra.mxu0 %v139
    %230 = vmatpush.msra.mxu0 %v135
    %231 = vmatpush.msra.mxu0 %v131
    %232 = vmatpush.msra.mxu0 %v127
    %233 = vmatpush.msra.mxu0 %v123
    %234 = vmatpush.msra.mxu0 %v119
    %235 = vmatpush.msra.mxu0 %v115
    %236 = vmatpush.msra.mxu0 %v111
    %237 = vmatpush.msra.mxu0 %v107
    %238 = vmatpush.msra.mxu0 %v103
    %239 = vmatpush.msra.mxu0 %v99
    %240 = vmatpush.msra.mxu0 %v95
    %241 = vmatpush.msra.mxu0 %v91
    %242 = vmatpush.msra.mxu0 %v87
    %243 = vmatmul.f32.gmra.mxu0 %v82
    %v244 = vpop.f32.mrf.mxu0
    %v245 = vadd.f32 %v153, %v244
    %246 = vmatmul.f32.gmra.mxu0 %v83
    %v247 = vpop.f32.mrf.mxu0
    %v248 = vadd.f32 %v153, %v247
    %249 = vdwg.mxu0
    %v250 = vmul.f32 %v176, %v176
    %v251 = vmul.f32 %v199, %v199
    %v252 = vmul.f32 %v222, %v222
    %v253 = vmul.f32 %v245, %v245
    %v254 = vmul.f32 %v179, %v179
    %v255 = vmul.f32 %v202, %v202
    %v256 = vmul.f32 %v225, %v225
    %v257 = vmul.f32 %v248, %v248
    %v258 = vmul.f32 %v176, 0.5
    %v259 = vmul.f32 %v199, 0.5
    %v260 = vmul.f32 %v222, 0.5
    %v261 = vmul.f32 %v245, 0.5
    %v262 = vmul.f32 %v179, 0.5
    %v263 = vmul.f32 %v202, 0.5
    %v264 = vmul.f32 %v225, 0.5
    %v265 = vmul.f32 %v248, 0.5
    %v266 = vmul.f32 %v176, 0.044715
    %v267 = vmul.f32 %v199, 0.044715
    %v268 = vmul.f32 %v222, 0.044715
    %v269 = vmul.f32 %v245, 0.044715
    %v270 = vmul.f32 %v179, 0.044715
    %v271 = vmul.f32 %v202, 0.044715
    %v272 = vmul.f32 %v225, 0.044715
    %v273 = vmul.f32 %v248, 0.044715
    %v274 = vmul.f32 %v266, %v250
    %v275 = vmul.f32 %v267, %v251
    %v276 = vmul.f32 %v268, %v252
    %v277 = vmul.f32 %v269, %v253
    %v278 = vmul.f32 %v270, %v254
    %v279 = vmul.f32 %v271, %v255
    %v280 = vmul.f32 %v272, %v256
    %v281 = vmul.f32 %v273, %v257
    %v282 = vadd.f32 %v176, %v274
    %v283 = vadd.f32 %v199, %v275
    %v284 = vadd.f32 %v222, %v276
    %v285 = vadd.f32 %v245, %v277
    %v286 = vadd.f32 %v179, %v278
    %v287 = vadd.f32 %v202, %v279
    %v288 = vadd.f32 %v225, %v280
    %v289 = vadd.f32 %v248, %v281
    %v290 = vmul.f32 %v282, 0.7978846
    %v291 = vmul.f32 %v283, 0.7978846
    %v292 = vmul.f32 %v284, 0.7978846
    %v293 = vmul.f32 %v285, 0.7978846
    %v294 = vmul.f32 %v286, 0.7978846
    %v295 = vmul.f32 %v287, 0.7978846
    %v296 = vmul.f32 %v288, 0.7978846
    %v297 = vmul.f32 %v289, 0.7978846
    %v298 = vtanh.pop %v290
    %v299 = vtanh.pop %v291
    %v300 = vtanh.pop %v292
    %v301 = vtanh.pop %v293
    %v302 = vtanh.pop %v294
    %v303 = vtanh.pop %v295
    %v304 = vtanh.pop %v296
    %v305 = vtanh.pop %v297
    %v306 = vadd.f32 %v298, 1.0
    %v307 = vadd.f32 %v299, 1.0
    %v308 = vadd.f32 %v300, 1.0
    %v309 = vadd.f32 %v301, 1.0
    %v310 = vadd.f32 %v302, 1.0
    %v311 = vadd.f32 %v303, 1.0
    %v312 = vadd.f32 %v304, 1.0
    %v313 = vadd.f32 %v305, 1.0
    %v314 = vmul.f32 %v258, %v306
    %v315 = vmul.f32 %v259, %v307
    %v316 = vmul.f32 %v260, %v308
    %v317 = vmul.f32 %v261, %v309
    %v318 = vmul.f32 %v262, %v310
    %v319 = vmul.f32 %v263, %v311
    %v320 = vmul.f32 %v264, %v312
    %v321 = vmul.f32 %v265, %v313
    %v322 = vld [vmem:[#allocation8] sm:$0xff]
    %v323 = vld [vmem:[#allocation8 + $0x8] sm:$0xff]
    %v324 = vld [vmem:[#allocation8 + $0x10] sm:$0xff]
    %v325 = vld [vmem:[#allocation8 + $0x18] sm:$0xff]
    %v326 = vld [vmem:[#allocation8 + $0x20] sm:$0xff]
    %v327 = vld [vmem:[#allocation8 + $0x28] sm:$0xff]
    %v328 = vld [vmem:[#allocation8 + $0x30] sm:$0xff]
    %v329 = vld [vmem:[#allocation8 + $0x38] sm:$0xff]
    %v330 = vld [vmem:[#allocation8 + $0x40] sm:$0xff]
    %v331 = vld [vmem:[#allocation8 + $0x48] sm:$0xff]
    %v332 = vld [vmem:[#allocation8 + $0x50] sm:$0xff]
    %v333 = vld [vmem:[#allocation8 + $0x58] sm:$0xff]
    %v334 = vld [vmem:[#allocation8 + $0x60] sm:$0xff]
    %v335 = vld [vmem:[#allocation8 + $0x68] sm:$0xff]
    %v336 = vld [vmem:[#allocation8 + $0x70] sm:$0xff]
    %v337 = vld [vmem:[#allocation8 + $0x78] sm:$0xff]
    %v338 = vld [vmem:[#allocation8 + $0x80] sm:$0xff]
    %v339 = vld [vmem:[#allocation8 + $0x88] sm:$0xff]
    %v340 = vld [vmem:[#allocation8 + $0x90] sm:$0xff]
    %v341 = vld [vmem:[#allocation8 + $0x98] sm:$0xff]
    %v342 = vld [vmem:[#allocation8 + $0xa0] sm:$0xff]
    %v343 = vld [vmem:[#allocation8 + $0xa8] sm:$0xff]
    %v344 = vld [vmem:[#allocation8 + $0xb0] sm:$0xff]
    %v345 = vld [vmem:[#allocation8 + $0xb8] sm:$0xff]
    %v346 = vld [vmem:[#allocation8 + $0xc0] sm:$0xff]
    %v347 = vld [vmem:[#allocation8 + $0xc8] sm:$0xff]
    %v348 = vld [vmem:[#allocation8 + $0xd0] sm:$0xff]
    %v349 = vld [vmem:[#allocation8 + $0xd8] sm:$0xff]
    %v350 = vld [vmem:[#allocation8 + $0xe0] sm:$0xff]
    %v351 = vld [vmem:[#allocation8 + $0xe8] sm:$0xff]
    %v352 = vld [vmem:[#allocation8 + $0xf0] sm:$0xff]
    %v353 = vld [vmem:[#allocation8 + $0xf8] sm:$0xff]
    %v354 = vld [vmem:[#allocation8 + $0x100] sm:$0xff]
    %v355 = vld [vmem:[#allocation8 + $0x108] sm:$0xff]
    %v356 = vld [vmem:[#allocation8 + $0x110] sm:$0xff]
    %v357 = vld [vmem:[#allocation8 + $0x118] sm:$0xff]
    %v358 = vld [vmem:[#allocation8 + $0x120] sm:$0xff]
    %v359 = vld [vmem:[#allocation8 + $0x128] sm:$0xff]
    %v360 = vld [vmem:[#allocation8 + $0x130] sm:$0xff]
    %v361 = vld [vmem:[#allocation8 + $0x138] sm:$0xff]
    %v362 = vld [vmem:[#allocation8 + $0x140] sm:$0xff]
    %v363 = vld [vmem:[#allocation8 + $0x148] sm:$0xff]
    %v364 = vld [vmem:[#allocation8 + $0x150] sm:$0xff]
    %v365 = vld [vmem:[#allocation8 + $0x158] sm:$0xff]
    %v366 = vld [vmem:[#allocation8 + $0x160] sm:$0xff]
    %v367 = vld [vmem:[#allocation8 + $0x168] sm:$0xff]
    %v368 = vld [vmem:[#allocation8 + $0x170] sm:$0xff]
    %v369 = vld [vmem:[#allocation8 + $0x178] sm:$0xff]
    %v370 = vld [vmem:[#allocation8 + $0x180] sm:$0xff]
    %v371 = vld [vmem:[#allocation8 + $0x188] sm:$0xff]
    %v372 = vld [vmem:[#allocation8 + $0x190] sm:$0xff]
    %v373 = vld [vmem:[#allocation8 + $0x198] sm:$0xff]
    %v374 = vld [vmem:[#allocation8 + $0x1a0] sm:$0xff]
    %v375 = vld [vmem:[#allocation8 + $0x1a8] sm:$0xff]
    %v376 = vld [vmem:[#allocation8 + $0x1b0] sm:$0xff]
    %v377 = vld [vmem:[#allocation8 + $0x1b8] sm:$0xff]
    %v378 = vld [vmem:[#allocation8 + $0x1c0] sm:$0xff]
    %v379 = vld [vmem:[#allocation8 + $0x1c8] sm:$0xff]
    %v380 = vld [vmem:[#allocation8 + $0x1d0] sm:$0xff]
    %v381 = vld [vmem:[#allocation8 + $0x1d8] sm:$0xff]
    %v382 = vld [vmem:[#allocation8 + $0x1e0] sm:$0xff]
    %v383 = vld [vmem:[#allocation8 + $0x1e8] sm:$0xff]
    %v384 = vld [vmem:[#allocation8 + $0x1f0] sm:$0xff]
    %v385 = vld [vmem:[#allocation8 + $0x1f8] sm:$0xff]
    %v386 = vld [vmem:[%s4] sm:$0x1]
    %v388 = vperm.slane %v386, 0
    %390 = vmatpush.msra.mxu0 %v337
    %391 = vmatpush.msra.mxu0 %v336
    %392 = vmatpush.msra.mxu0 %v335
    %393 = vmatpush.msra.mxu0 %v334
    %394 = vmatpush.msra.mxu0 %v333
    %395 = vmatpush.msra.mxu0 %v332
    %396 = vmatpush.msra.mxu0 %v331
    %397 = vmatpush.msra.mxu0 %v330
    %398 = vmatpush.msra.mxu0 %v329
    %399 = vmatpush.msra.mxu0 %v328
    %400 = vmatpush.msra.mxu0 %v327
    %401 = vmatpush.msra.mxu0 %v326
    %402 = vmatpush.msra.mxu0 %v325
    %403 = vmatpush.msra.mxu0 %v324
    %404 = vmatpush.msra.mxu0 %v323
    %405 = vmatpush.msra.mxu0 %v322
    %406 = vmatmul.f32.gmra.mxu0 %v314
    %v407 = vpop.f32.mrf.mxu0
    %v408 = vadd.f32 %v388, %v407
    %409 = vmatmul.f32.gmra.mxu0 %v318
    %v410 = vpop.f32.mrf.mxu0
    %v411 = vadd.f32 %v388, %v410
    %412 = vdwg.mxu0
    %413 = vmatpush.msra.mxu0 %v353
    %414 = vmatpush.msra.mxu0 %v352
    %415 = vmatpush.msra.mxu0 %v351
    %416 = vmatpush.msra.mxu0 %v350
    %417 = vmatpush.msra.mxu0 %v349
    %418 = vmatpush.msra.mxu0 %v348
    %419 = vmatpush.msra.mxu0 %v347
    %420 = vmatpush.msra.mxu0 %v346
    %421 = vmatpush.msra.mxu0 %v345
    %422 = vmatpush.msra.mxu0 %v344
    %423 = vmatpush.msra.mxu0 %v343
    %424 = vmatpush.msra.mxu0 %v342
    %425 = vmatpush.msra.mxu0 %v341
    %426 = vmatpush.msra.mxu0 %v340
    %427 = vmatpush.msra.mxu0 %v339
    %428 = vmatpush.msra.mxu0 %v338
    %429 = vmatmul.f32.gmra.mxu0 %v315
    %v430 = vpop.f32.mrf.mxu0
    %v431 = vadd.f32 %v408, %v430
    %432 = vmatmul.f32.gmra.mxu0 %v319
    %v433 = vpop.f32.mrf.mxu0
    %v434 = vadd.f32 %v411, %v433
    %435 = vdwg.mxu0
    %436 = vmatpush.msra.mxu0 %v369
    %437 = vmatpush.msra.mxu0 %v368
    %438 = vmatpush.msra.mxu0 %v367
    %439 = vmatpush.msra.mxu0 %v366
    %440 = vmatpush.msra.mxu0 %v365
    %441 = vmatpush.msra.mxu0 %v364
    %442 = vmatpush.msra.mxu0 %v363
    %443 = vmatpush.msra.mxu0 %v362
    %444 = vmatpush.msra.mxu0 %v361
    %445 = vmatpush.msra.mxu0 %v360
    %446 = vmatpush.msra.mxu0 %v359
    %447 = vmatpush.msra.mxu0 %v358
    %448 = vmatpush.msra.mxu0 %v357
    %449 = vmatpush.msra.mxu0 %v356
    %450 = vmatpush.msra.mxu0 %v355
    %451 = vmatpush.msra.mxu0 %v354
    %452 = vmatmul.f32.gmra.mxu0 %v316
    %v453 = vpop.f32.mrf.mxu0
    %v454 = vadd.f32 %v431, %v453
    %455 = vmatmul.f32.gmra.mxu0 %v320
    %v456 = vpop.f32.mrf.mxu0
    %v457 = vadd.f32 %v434, %v456
    %458 = vdwg.mxu0
    %459 = vmatpush.msra.mxu0 %v385
    %460 = vmatpush.msra.mxu0 %v384
    %461 = vmatpush.msra.mxu0 %v383
    %462 = vmatpush.msra.mxu0 %v382
    %463 = vmatpush.msra.mxu0 %v381
    %464 = vmatpush.msra.mxu0 %v380
    %465 = vmatpush.msra.mxu0 %v379
    %466 = vmatpush.msra.mxu0 %v378
    %467 = vmatpush.msra.mxu0 %v377
    %468 = vmatpush.msra.mxu0 %v376
    %469 = vmatpush.msra.mxu0 %v375
    %470 = vmatpush.msra.mxu0 %v374
    %471 = vmatpush.msra.mxu0 %v373
    %472 = vmatpush.msra.mxu0 %v372
    %473 = vmatpush.msra.mxu0 %v371
    %474 = vmatpush.msra.mxu0 %v370
    %475 = vmatmul.f32.gmra.mxu0 %v317
    %v476 = vpop.f32.mrf.mxu0
    %v477 = vadd.f32 %v454, %v476
    %478 = vmatmul.f32.gmra.mxu0 %v321
    %v479 = vpop.f32.mrf.mxu0
    %v480 = vadd.f32 %v457, %v479
    %481 = vdwg.mxu0
    %482 = vst [vmem:[#allocation10] sm:$0xff] %v477
    %483 = vst [vmem:[#allocation10 + $0x8] sm:$0xff] %v480
    // Predicated region
    $region38: #{tpu_custom_call.1} parent=1 // pred_check
      _
    $region39: #{tpu_custom_call.1} parent=1 // pred_check_branch
      %485 = sbr.rel (0) target = $region41
    $region40: #{tpu_custom_call.1} parent=1 // pred_region
      %487 = vsyncadd [#allocation4], 0
      %s488 = sshll.u32 [#allocation10], 4
      %s489 = int_to_ptr.vmem [resolvable:$true] %s488
      %s490 = sshll.u32 %s5, 4
      %s491 = int_to_ptr.hbm [resolvable:$true] %s490
      %496 = dma.vmem_to_hbm [thread:$0]  %s489, 256, %s491, [#allocation4], 128, 128, 8
    $region41: #{tpu_custom_call.1} parent=1 // pred_fallthru
      _
    // Predicated region
    $region42: #{tpu_custom_call.1} parent=1 // pred_check
      _
    $region43: #{tpu_custom_call.1} parent=1 // pred_check_branch
      %498 = sbr.rel (0) target = $region45
    $region44: #{tpu_custom_call.1} parent=1 // pred_region
      %500 = dma.done [#allocation4], 256
    $region45: #{tpu_custom_call.1} parent=1 // pred_fallthru
      _
    %501 = vsyncpa [#allocation3], 1
    %502 = vsyncpa [#allocation6], 1
    %503 = vsyncpa [#allocation9], 1
    %504 = vsyncpa [#allocation4], 1

</llo_original>
